<compile_context>
chip_gen: v6e
topology: v6e:2x2x1
jax: 0.10.0
libtpu: 0.0.40
codegen_flags: <defaults>
</compile_context>

<pallas_src>
import jax
import jax.numpy as jnp
from jax import lax
from jax.experimental import pallas as pl
from jax.experimental.pallas import tpu as pltpu


def _round_up(v, m):
    return (v + m - 1) // m * m


def prequant_linear_kernel(a_params_ref,   # SMEM (2,) f32: [1/a_scale, a_zp]
                           x_ref,          # VMEM [tm, tk] f32
                           w_ref,          # VMEM [tn, tk] f32 (nn.Linear layout)
                           inv_ws_ref,     # VMEM [tn, 1] f32: 1 / w_scale
                           out_scale_ref,  # VMEM [1, tn] f32: a_scale * w_scale
                           b_ref,          # VMEM [1, tn] f32: bias
                           o_ref,          # VMEM [tm, tn] f32
                           acc_ref):       # VMEM scratch [tm, tn] f32
    k = pl.program_id(2)

    @pl.when(k == 0)
    def _():
        acc_ref[...] = jnp.zeros_like(acc_ref)

    inv_a_s = a_params_ref[0]
    a_zp = a_params_ref[1]

    # --- activation fake-quant (per-tensor, asymmetric, 8-bit) ---
    # Expressed directly as the zero-point-shifted integer (xq - a_zp):
    #   clip(round(x/a_s) + zp, 0, 255) - zp == clip(round(x*inv_a_s), -zp, 255-zp)
    # Result is an exact small integer, |v| <= 255 (exact in bf16).
    xq_i = jnp.clip(jnp.round(x_ref[...] * inv_a_s), -a_zp, 255.0 - a_zp)

    # --- weight fake-quant (per-out-channel, symmetric, 8-bit, zp == 0) ---
    wq = jnp.clip(jnp.round(w_ref[...] * inv_ws_ref[...]), -128.0, 127.0)

    # --- MXU matmul on exact small integers in bf16, f32 accumulate ---
    # Contract on the weight's last (in-feature) dim: no in-kernel transpose.
    acc_ref[...] += lax.dot_general(
        xq_i.astype(jnp.bfloat16), wq.astype(jnp.bfloat16),
        dimension_numbers=(((1,), (1,)), ((), ())),
        preferred_element_type=jnp.float32)

    @pl.when(k == pl.num_programs(2) - 1)
    def _():
        # Dequant scale (a_scale * w_scale[out]) applied post-MXU, then bias+ReLU.
        y = acc_ref[...] * out_scale_ref[...] + b_ref[...]
        o_ref[...] = jnp.maximum(y, 0.0).astype(o_ref.dtype)


def pre_quantized_linear(x, weight, bias, a_scale, a_zp, w_scale,
                         *, tm=256, tn=256, tk=512):
    """PreQuantizedLayer(Linear, ReLU) forward via a tiled Pallas kernel.

    x:       [B, In]  f32
    weight:  [Out, In] f32 (nn.Linear layout)
    bias:    [Out]     f32
    a_scale, a_zp: per-tensor activation quant params (scalars)
    w_scale: [Out]     per-out-channel symmetric weight scales
    """
    B, In = x.shape
    Out, _ = weight.shape

    # Clamp tiles to the (padded) problem size, keeping (8, 128) alignment.
    tm = min(tm, _round_up(B, 8))
    tn = min(tn, _round_up(Out, 128))
    tk = min(tk, _round_up(In, 128))

    Bp = _round_up(B, tm)
    Outp = _round_up(Out, tn)
    Inp = _round_up(In, tk)

    # Zero-pad to tile multiples (padded rows/cols quantize to exact 0 and are
    # sliced off at the end; padded bias is 0 so ReLU garbage cannot leak).
    xp = jnp.pad(x, ((0, Bp - B), (0, Inp - In)))
    wp = jnp.pad(weight, ((0, Outp - Out), (0, Inp - In)))
    bp = jnp.pad(bias.reshape(1, Out), ((0, 0), (0, Outp - Out)))
    ws = jnp.pad(w_scale.reshape(Out, 1), ((0, Outp - Out), (0, 0)),
                 constant_values=1.0)                              # [Outp, 1]

    inv_ws = (1.0 / ws).astype(jnp.float32)                        # [Outp, 1]
    out_scale = (a_scale * ws).reshape(1, Outp).astype(jnp.float32)
    a_params = jnp.stack([1.0 / a_scale, a_zp]).astype(jnp.float32)  # SMEM (2,)

    grid = (Bp // tm, Outp // tn, Inp // tk)

    # TODO(synk): for pure inference, hoist the weight fake-quant out of the
    # kernel entirely (precompute int8 wq + scales in HBM) to cut weight DMA 4x.
    out_padded = pl.pallas_call(
        prequant_linear_kernel,
        out_shape=jax.ShapeDtypeStruct((Bp, Outp), jnp.float32),
        grid_spec=pltpu.PrefetchScalarGridSpec(
            num_scalar_prefetch=0,
            grid=grid,
            in_specs=[
                pl.BlockSpec(memory_space=pltpu.MemorySpace.SMEM),  # a_params
                pl.BlockSpec((tm, tk), lambda i, j, k: (i, k)),     # x
                pl.BlockSpec((tn, tk), lambda i, j, k: (j, k)),     # weight
                pl.BlockSpec((tn, 1), lambda i, j, k: (j, 0)),      # 1/w_scale
                pl.BlockSpec((1, tn), lambda i, j, k: (0, j)),      # out_scale
                pl.BlockSpec((1, tn), lambda i, j, k: (0, j)),      # bias
            ],
            out_specs=pl.BlockSpec((tm, tn), lambda i, j, k: (i, j)),
            scratch_shapes=[pltpu.VMEM((tm, tn), jnp.float32)],
        ),
        compiler_params=pltpu.CompilerParams(
            dimension_semantics=("parallel", "parallel", "arbitrary")),
    )(a_params, xp, wp, inv_ws, out_scale, bp)

    return out_padded[:B, :Out]


# ---------------- plain-JAX reference (original module semantics) ----------------
def reference(x, weight, bias, a_scale, a_zp, w_scale):
    xq = jnp.clip(jnp.round(x / a_scale) + a_zp, 0.0, 255.0)
    x_dq = (xq - a_zp) * a_scale
    wq = jnp.clip(jnp.round(weight / w_scale[:, None]), -128.0, 127.0)
    w_dq = wq * w_scale[:, None]
    y = x_dq @ w_dq.T + bias[None, :]
    return jnp.maximum(y, 0.0)


if __name__ == "__main__":
    key = jax.random.PRNGKey(0)
    k_x, k_w, k_b = jax.random.split(key, 3)

    B, In, Out = 8, 32, 32                      # small demo shapes
    x = jax.random.normal(k_x, (B, In), dtype=jnp.float32)
    weight = jax.random.normal(k_w, (Out, In), dtype=jnp.float32) * 0.1
    bias = jax.random.normal(k_b, (Out,), dtype=jnp.float32) * 0.01

    # --- "observer" calibration glue (plain JAX) ---
    # activation: per-tensor asymmetric uint8
    x_min = jnp.minimum(jnp.min(x), 0.0)
    x_max = jnp.maximum(jnp.max(x), 0.0)
    a_scale = jnp.maximum((x_max - x_min) / 255.0, 1e-8)
    a_zp = jnp.clip(jnp.round(-x_min / a_scale), 0.0, 255.0)

    # weight: per-output-channel symmetric int8 (ch_axis=0), zero_point = 0
    w_absmax = jnp.max(jnp.abs(weight), axis=1)                  # [Out]
    w_scale = jnp.maximum(w_absmax / 127.0, 1e-8).astype(jnp.float32)

    out = pre_quantized_linear(x, weight, bias, a_scale, a_zp, w_scale)
    out = jax.block_until_ready(out)

    ref = reference(x, weight, bias, a_scale, a_zp, w_scale)
    assert out.shape == (B, Out)
    assert jnp.allclose(out, ref, atol=1e-4, rtol=1e-4), (
        "mismatch vs reference, max abs err = "
        f"{float(jnp.max(jnp.abs(out - ref)))}")

    # TODO(synk): gamma-fusion path of QLinear (gamma is not None) and the
    # 'group'/'hybrid' specialized activation quantizers are not kernelized;
    # only the default 'normal' per-tensor path is implemented.
    print("KERNEL_OK")
</pallas_src>

<mosaic_0001>
module attributes {stable_mosaic.version = 11 : i64} {
  func.func @prequant_linear_kernel(%arg0: i32, %arg1: i32, %arg2: i32, %arg3: memref<2xf32, #tpu.memory_space<smem>>, %arg4: memref<8x128xf32, #tpu.memory_space<vmem>>, %arg5: memref<128x128xf32, #tpu.memory_space<vmem>>, %arg6: memref<128x1xf32, #tpu.memory_space<vmem>>, %arg7: memref<1x128xf32, #tpu.memory_space<vmem>>, %arg8: memref<1x128xf32, #tpu.memory_space<vmem>>, %arg9: memref<8x128xf32, #tpu.memory_space<vmem>>, %arg10: memref<8x128xf32, #tpu.memory_space<vmem>>) attributes {dimension_semantics = [#tpu.dimension_semantics<parallel>, #tpu.dimension_semantics<parallel>, #tpu.dimension_semantics<arbitrary>], iteration_bounds = array<i64: 1, 1, 1>, scalar_prefetch = 0 : i64, scratch_operands = 1 : i64, tpu.core_type = #tpu.core_type<tc>, window_params = [{transform_indices = @transform_0, window_bounds = array<i64: 2>}, {transform_indices = @transform_1, window_bounds = array<i64: 8, 128>}, {transform_indices = @transform_2, window_bounds = array<i64: 128, 128>}, {transform_indices = @transform_3, window_bounds = array<i64: 128, 1>}, {transform_indices = @transform_4, window_bounds = array<i64: 1, 128>}, {transform_indices = @transform_5, window_bounds = array<i64: 1, 128>}, {transform_indices = @transform_6, window_bounds = array<i64: 8, 128>}]} {
    %c0_i32 = arith.constant 0 : i32
    %0 = arith.cmpi eq, %arg2, %c0_i32 : i32
    %1 = arith.extui %0 : i1 to i32
    %c0_i32_0 = arith.constant 0 : i32
    %2 = arith.cmpi ne, %1, %c0_i32_0 : i32
    scf.if %2 {
      %cst_17 = arith.constant 0.000000e+00 : f32
      %33 = vector.broadcast %cst_17 : f32 to vector<8x128xf32>
      %c0_18 = arith.constant 0 : index
      %c0_19 = arith.constant 0 : index
      %34 = vector.load %arg10[%c0_18, %c0_19] : memref<8x128xf32, #tpu.memory_space<vmem>>, vector<8x128xf32>
      tpu.vector_store %arg10[%c0_18, %c0_19], %33 {strides = array<i32>} : memref<8x128xf32, #tpu.memory_space<vmem>>, vector<8x128xf32>,
    } else {
    }
    %c0 = arith.constant 0 : index
    %3 = memref.load %arg3[%c0] : memref<2xf32, #tpu.memory_space<smem>>
    %c1 = arith.constant 1 : index
    %4 = memref.load %arg3[%c1] : memref<2xf32, #tpu.memory_space<smem>>
    %c0_1 = arith.constant 0 : index
    %c0_2 = arith.constant 0 : index
    %5 = vector.load %arg4[%c0_1, %c0_2] : memref<8x128xf32, #tpu.memory_space<vmem>>, vector<8x128xf32>
    %6 = vector.broadcast %3 : f32 to vector<8x128xf32>
    %7 = arith.mulf %5, %6 : vector<8x128xf32>
    %8 = math.roundeven %7 : vector<8x128xf32>
    %cst = arith.constant 0.000000e+00 : f32
    %9 = arith.subf %cst, %4 : f32
    %cst_3 = arith.constant 2.550000e+02 : f32
    %10 = arith.subf %cst_3, %4 : f32
    %11 = vector.broadcast %9 : f32 to vector<8x128xf32>
    %12 = arith.maximumf %11, %8 : vector<8x128xf32>
    %13 = vector.broadcast %10 : f32 to vector<8x128xf32>
    %14 = arith.minimumf %13, %12 : vector<8x128xf32>
    %c0_4 = arith.constant 0 : index
    %c0_5 = arith.constant 0 : index
    %15 = vector.load %arg5[%c0_4, %c0_5] : memref<128x128xf32, #tpu.memory_space<vmem>>, vector<128x128xf32>
    %c0_6 = arith.constant 0 : index
    %c0_7 = arith.constant 0 : index
    %16 = vector.load %arg6[%c0_6, %c0_7] : memref<128x1xf32, #tpu.memory_space<vmem>>, vector<128x1xf32>
    %17 = vector.broadcast %16 : vector<128x1xf32> to vector<128x128xf32>
    %18 = arith.mulf %15, %17 : vector<128x128xf32>
    %19 = math.roundeven %18 : vector<128x128xf32>
    %cst_8 = arith.constant -1.280000e+02 : f32
    %cst_9 = arith.constant 1.270000e+02 : f32
    %20 = vector.broadcast %cst_8 : f32 to vector<128x128xf32>
    %21 = arith.maximumf %20, %19 : vector<128x128xf32>
    %22 = vector.broadcast %cst_9 : f32 to vector<128x128xf32>
    %23 = arith.minimumf %22, %21 : vector<128x128xf32>
    %c0_10 = arith.constant 0 : index
    %c0_11 = arith.constant 0 : index
    %24 = vector.load %arg10[%c0_10, %c0_11] : memref<8x128xf32, #tpu.memory_space<vmem>>, vector<8x128xf32>
    %25 = arith.truncf %14 : vector<8x128xf32> to vector<8x128xbf16>
    %26 = arith.truncf %23 : vector<128x128xf32> to vector<128x128xbf16>
    %cst_12 = arith.constant dense<0.000000e+00> : vector<8x128xf32>
    %27 = tpu.matmul %25, %26, %cst_12 {dimension_numbers = #tpu.dot_dimension_numbers<[1], [1], [0], [0], [0, 0, 1, 0], [], []>} : vector<8x128xbf16>, vector<128x128xbf16>, vector<8x128xf32> -> vector<8x128xf32>
    %28 = arith.addf %24, %27 : vector<8x128xf32>
    %c0_13 = arith.constant 0 : index
    %c0_14 = arith.constant 0 : index
    %29 = vector.load %arg10[%c0_13, %c0_14] : memref<8x128xf32, #tpu.memory_space<vmem>>, vector<8x128xf32>
    tpu.vector_store %arg10[%c0_13, %c0_14], %28 {strides = array<i32>} : memref<8x128xf32, #tpu.memory_space<vmem>>, vector<8x128xf32>,
    %c0_i32_15 = arith.constant 0 : i32
    %30 = arith.cmpi eq, %arg2, %c0_i32_15 : i32
    %31 = arith.extui %30 : i1 to i32
    %c0_i32_16 = arith.constant 0 : i32
    %32 = arith.cmpi ne, %31, %c0_i32_16 : i32
    scf.if %32 {
      %c0_17 = arith.constant 0 : index
      %c0_18 = arith.constant 0 : index
      %33 = vector.load %arg10[%c0_17, %c0_18] : memref<8x128xf32, #tpu.memory_space<vmem>>, vector<8x128xf32>
      %c0_19 = arith.constant 0 : index
      %c0_20 = arith.constant 0 : index
      %34 = vector.load %arg7[%c0_19, %c0_20] : memref<1x128xf32, #tpu.memory_space<vmem>>, vector<1x128xf32>
      %35 = vector.broadcast %34 : vector<1x128xf32> to vector<8x128xf32>
      %36 = arith.mulf %33, %35 : vector<8x128xf32>
      %c0_21 = arith.constant 0 : index
      %c0_22 = arith.constant 0 : index
      %37 = vector.load %arg8[%c0_21, %c0_22] : memref<1x128xf32, #tpu.memory_space<vmem>>, vector<1x128xf32>
      %38 = vector.broadcast %37 : vector<1x128xf32> to vector<8x128xf32>
      %39 = arith.addf %36, %38 : vector<8x128xf32>
      %cst_23 = arith.constant 0.000000e+00 : f32
      %40 = vector.broadcast %cst_23 : f32 to vector<8x128xf32>
      %41 = arith.maximumf %39, %40 : vector<8x128xf32>
      %c0_24 = arith.constant 0 : index
      %c0_25 = arith.constant 0 : index
      %42 = vector.load %arg9[%c0_24, %c0_25] : memref<8x128xf32, #tpu.memory_space<vmem>>, vector<8x128xf32>
      tpu.vector_store %arg9[%c0_24, %c0_25], %41 {strides = array<i32>} : memref<8x128xf32, #tpu.memory_space<vmem>>, vector<8x128xf32>,
    } else {
    }
    return
  }
  func.func @transform_0(%arg0: i32, %arg1: i32, %arg2: i32) -> i32 {
    %c0_i32 = arith.constant 0 : i32
    %c0_i32_0 = arith.constant 0 : i32
    return %c0_i32 : i32
  }
  func.func @transform_1(%arg0: i32, %arg1: i32, %arg2: i32) -> (i32, i32) {
    %c0_i32 = arith.constant 0 : i32
    return %arg0, %arg2 : i32, i32
  }
  func.func @transform_2(%arg0: i32, %arg1: i32, %arg2: i32) -> (i32, i32) {
    %c0_i32 = arith.constant 0 : i32
    return %arg1, %arg2 : i32, i32
  }
  func.func @transform_3(%arg0: i32, %arg1: i32, %arg2: i32) -> (i32, i32) {
    %c0_i32 = arith.constant 0 : i32
    %c0_i32_0 = arith.constant 0 : i32
    return %arg1, %c0_i32 : i32, i32
  }
  func.func @transform_4(%arg0: i32, %arg1: i32, %arg2: i32) -> (i32, i32) {
    %c0_i32 = arith.constant 0 : i32
    %c0_i32_0 = arith.constant 0 : i32
    return %c0_i32, %arg1 : i32, i32
  }
  func.func @transform_5(%arg0: i32, %arg1: i32, %arg2: i32) -> (i32, i32) {
    %c0_i32 = arith.constant 0 : i32
    %c0_i32_0 = arith.constant 0 : i32
    return %c0_i32, %arg1 : i32, i32
  }
  func.func @transform_6(%arg0: i32, %arg1: i32, %arg2: i32) -> (i32, i32) {
    %c0_i32 = arith.constant 0 : i32
    return %arg0, %arg1 : i32, i32
  }
}

</mosaic_0001>

<llo_original>
// kernel: tpu_custom_call.1
$region0: #{tpu_custom_call.1}
  #allocation0 [shape = 'u32[]', space=smem, size = 0x4, offset = 0x4, fixed_abs, tag = 'smem constant byte address 0x4 - core index']
  #allocation1 [shape = 'u32[144,128]{1,0:T(1,128)}', space=vmem, size = 0x12000, scoped, tag = 'internal scratch']
  #allocation2 [shape = 'f32[8,128]{1,0:T(8,128)}', space=vmem, size = 0x1000, scoped, tag = 'scratch operand']
  %s0 = inlined_call_operand.vmem [shape: f32[2], index: 0, kind: input, shape index: {}]
  %s1 = inlined_call_operand.hbm [shape: f32[8,128], index: 1, kind: input, shape index: {}]
  %s2 = inlined_call_operand.vmem [shape: f32[128,128], index: 2, kind: input, shape index: {}]
  %s3 = inlined_call_operand.vmem [shape: f32[128,1], index: 3, kind: input, shape index: {}]
  %s4 = inlined_call_operand.vmem [shape: f32[1,128], index: 4, kind: input, shape index: {}]
  %s5 = inlined_call_operand.vmem [shape: f32[1,128], index: 5, kind: input, shape index: {}]
  %s6 = inlined_call_operand.hbm [shape: f32[8,128], index: 6, kind: output, shape index: {}]
  %s7 = sld [smem:[#allocation0]]
  $region50: #{tpu_custom_call.1} parent=0
    _
  %s9 = ssub.s32 1, %s7
  %s10 = scalar_select 0, %s9, %s7
  $region1: #{tpu_custom_call.1} parent=0
    #allocation3 [shape = 'u8[512]{0}', space=smem, size = 0x200, scoped, tag = 'input window, operand 0, single buffered']
    #allocation4 [shape = 's32[1]{0}', space=sflag, size = 0x4, scoped, tag = 'scoped memory for tpu_custom_call.1']
    #allocation5 [shape = 's32[1]{0}', space=sflag, size = 0x4, scoped, tag = 'scoped memory for tpu_custom_call.1']
    #allocation6 [shape = 's32[1]{0}', space=sflag, size = 0x4, scoped, tag = 'scoped memory for tpu_custom_call.1']
    #allocation7 [shape = 'u8[4096]{0}', space=vmem, size = 0x1000, scoped, tag = 'input window, operand 1, single buffered']
    #allocation8 [shape = 'u8[4096]{0}', space=vmem, size = 0x1000, scoped, tag = 'output window, operand 0, single buffered']
    %11 = vsyncpa [#allocation6], 0
    %12 = vsyncpa [#allocation4], 0
    %13 = vsyncpa [#allocation5], 0
    // Predicated region
    $region2: #{tpu_custom_call.1} parent=1 // pred_check
      _
    $region3: #{tpu_custom_call.1} parent=1 // pred_check_branch
      %15 = sbr.rel (0) target = $region5
    $region4: #{tpu_custom_call.1} parent=1 // pred_region
      %s17 = ssub.s32 16, 16
      %18 = vsyncadd [#allocation6], %s17
      %s20 = sshll.u32 %s0, 4
      %s21 = int_to_ptr.vmem [resolvable:$true] %s20
      %23 = dma.vmem_to_smem %s21, 16, [#allocation3], [#allocation6]
    $region5: #{tpu_custom_call.1} parent=1 // pred_fallthru
      _
    // Predicated region
    $region6: #{tpu_custom_call.1} parent=1 // pred_check
      _
    $region7: #{tpu_custom_call.1} parent=1 // pred_check_branch
      %25 = sbr.rel (0) target = $region9
    $region8: #{tpu_custom_call.1} parent=1 // pred_region
      %s27 = ssub.s32 128, 128
      %28 = vsyncadd [#allocation4], %s27
      %s30 = sshll.u32 [#allocation7], 4
      %s31 = int_to_ptr.vmem [resolvable:$true] %s30
      %33 = dma.hbm_to_vmem [thread:$0]  %s1, 128, %s31, [#allocation4]
    $region9: #{tpu_custom_call.1} parent=1 // pred_fallthru
      _
    // Predicated region
    $region10: #{tpu_custom_call.1} parent=1 // pred_check
      _
    $region11: #{tpu_custom_call.1} parent=1 // pred_check_branch
      %35 = sbr.rel (0) target = $region13
    $region12: #{tpu_custom_call.1} parent=1 // pred_region
      _
    $region13: #{tpu_custom_call.1} parent=1 // pred_fallthru
      _
    // Predicated region
    $region14: #{tpu_custom_call.1} parent=1 // pred_check
      _
    $region15: #{tpu_custom_call.1} parent=1 // pred_check_branch
      %37 = sbr.rel (0) target = $region17
    $region16: #{tpu_custom_call.1} parent=1 // pred_region
      _
    $region17: #{tpu_custom_call.1} parent=1 // pred_fallthru
      _
    // Predicated region
    $region18: #{tpu_custom_call.1} parent=1 // pred_check
      _
    $region19: #{tpu_custom_call.1} parent=1 // pred_check_branch
      %39 = sbr.rel (0) target = $region21
    $region20: #{tpu_custom_call.1} parent=1 // pred_region
      _
    $region21: #{tpu_custom_call.1} parent=1 // pred_fallthru
      _
    // Predicated region
    $region22: #{tpu_custom_call.1} parent=1 // pred_check
      _
    $region23: #{tpu_custom_call.1} parent=1 // pred_check_branch
      %41 = sbr.rel (0) target = $region25
    $region24: #{tpu_custom_call.1} parent=1 // pred_region
      _
    $region25: #{tpu_custom_call.1} parent=1 // pred_fallthru
      _
    // Predicated region
    $region26: #{tpu_custom_call.1} parent=1 // pred_check
      _
    $region27: #{tpu_custom_call.1} parent=1 // pred_check_branch
      %43 = sbr.rel (0) target = $region29
    $region28: #{tpu_custom_call.1} parent=1 // pred_region
      %44 = dma.done [#allocation6], 16
    $region29: #{tpu_custom_call.1} parent=1 // pred_fallthru
      _
    // Predicated region
    $region30: #{tpu_custom_call.1} parent=1 // pred_check
      _
    $region31: #{tpu_custom_call.1} parent=1 // pred_check_branch
      %46 = sbr.rel (0) target = $region33
    $region32: #{tpu_custom_call.1} parent=1 // pred_region
      %47 = dma.done [#allocation4], 128
    $region33: #{tpu_custom_call.1} parent=1 // pred_fallthru
      _
    %48 = sfence
    %p50 = scmp.eq.s32.totalorder 0, 0
    // Predicated region
    $region34: #{tpu_custom_call.1} parent=1 // pred_check
      %p51 = pneg %p50
    $region35: #{tpu_custom_call.1} parent=1 // pred_check_branch
      %53 = sbr.rel (%p51) target = $region37
    $region36: #{tpu_custom_call.1} parent=1 // pred_region
      %54 = vst [vmem:[#allocation2] sm:$0xff] 0.0
    $region37: #{tpu_custom_call.1} parent=1 // pred_fallthru
      _
    %s55 = sld [smem:[#allocation3]]
    %s56 = sld [smem:[#allocation3 + $0x1]]
    %v57 = vld [vmem:[#allocation7] sm:$0xff]
    %v58 = vstv %s55
    %v59 = vmul.f32 %v57, %v58
    %v60 = vround.ne.pseudo %v59
    %s61 = ssub.f32 0.0, %s56
    %s62 = ssub.f32 255.0, %s56
    %v63 = vstv %s61
    %v64 = vmax.f32 %v63, %v60
    %v65 = vstv %s62
    %v66 = vmin.f32 %v65, %v64
    %v67 = vld [vmem:[%s2] sm:$0xff]
    %v68 = vld [vmem:[%s2 + $0x8] sm:$0xff]
    %v69 = vld [vmem:[%s2 + $0x10] sm:$0xff]
    %v70 = vld [vmem:[%s2 + $0x18] sm:$0xff]
    %v71 = vld [vmem:[%s2 + $0x20] sm:$0xff]
    %v72 = vld [vmem:[%s2 + $0x28] sm:$0xff]
    %v73 = vld [vmem:[%s2 + $0x30] sm:$0xff]
    %v74 = vld [vmem:[%s2 + $0x38] sm:$0xff]
    %v75 = vld [vmem:[%s2 + $0x40] sm:$0xff]
    %v76 = vld [vmem:[%s2 + $0x48] sm:$0xff]
    %v77 = vld [vmem:[%s2 + $0x50] sm:$0xff]
    %v78 = vld [vmem:[%s2 + $0x58] sm:$0xff]
    %v79 = vld [vmem:[%s2 + $0x60] sm:$0xff]
    %v80 = vld [vmem:[%s2 + $0x68] sm:$0xff]
    %v81 = vld [vmem:[%s2 + $0x70] sm:$0xff]
    %v82 = vld [vmem:[%s2 + $0x78] sm:$0xff]
    %v83 = vld [vmem:[%s3] sm:$0xff]
    %v84 = vld [vmem:[%s3 + $0x8] sm:$0xff]
    %v85 = vld [vmem:[%s3 + $0x10] sm:$0xff]
    %v86 = vld [vmem:[%s3 + $0x18] sm:$0xff]
    %v87 = vld [vmem:[%s3 + $0x20] sm:$0xff]
    %v88 = vld [vmem:[%s3 + $0x28] sm:$0xff]
    %v89 = vld [vmem:[%s3 + $0x30] sm:$0xff]
    %v90 = vld [vmem:[%s3 + $0x38] sm:$0xff]
    %v91 = vld [vmem:[%s3 + $0x40] sm:$0xff]
    %v92 = vld [vmem:[%s3 + $0x48] sm:$0xff]
    %v93 = vld [vmem:[%s3 + $0x50] sm:$0xff]
    %v94 = vld [vmem:[%s3 + $0x58] sm:$0xff]
    %v95 = vld [vmem:[%s3 + $0x60] sm:$0xff]
    %v96 = vld [vmem:[%s3 + $0x68] sm:$0xff]
    %v97 = vld [vmem:[%s3 + $0x70] sm:$0xff]
    %v98 = vld [vmem:[%s3 + $0x78] sm:$0xff]
    %100 = vset.pattern.permute.xlu0 0
    %101 = vperm.xlu0 %100, %v83
    %v102 = vpop.permute.xlu0 %101
    %105 = vset.pattern.permute.xlu0 0
    %106 = vperm.xlu0 %105, %v84
    %v107 = vpop.permute.xlu0 %106
    %110 = vset.pattern.permute.xlu0 0
    %111 = vperm.xlu0 %110, %v85
    %v112 = vpop.permute.xlu0 %111
    %115 = vset.pattern.permute.xlu0 0
    %116 = vperm.xlu0 %115, %v86
    %v117 = vpop.permute.xlu0 %116
    %120 = vset.pattern.permute.xlu0 0
    %121 = vperm.xlu0 %120, %v87
    %v122 = vpop.permute.xlu0 %121
    %125 = vset.pattern.permute.xlu0 0
    %126 = vperm.xlu0 %125, %v88
    %v127 = vpop.permute.xlu0 %126
    %130 = vset.pattern.permute.xlu0 0
    %131 = vperm.xlu0 %130, %v89
    %v132 = vpop.permute.xlu0 %131
    %135 = vset.pattern.permute.xlu0 0
    %136 = vperm.xlu0 %135, %v90
    %v137 = vpop.permute.xlu0 %136
    %140 = vset.pattern.permute.xlu0 0
    %141 = vperm.xlu0 %140, %v91
    %v142 = vpop.permute.xlu0 %141
    %145 = vset.pattern.permute.xlu0 0
    %146 = vperm.xlu0 %145, %v92
    %v147 = vpop.permute.xlu0 %146
    %150 = vset.pattern.permute.xlu0 0
    %151 = vperm.xlu0 %150, %v93
    %v152 = vpop.permute.xlu0 %151
    %155 = vset.pattern.permute.xlu0 0
    %156 = vperm.xlu0 %155, %v94
    %v157 = vpop.permute.xlu0 %156
    %160 = vset.pattern.permute.xlu0 0
    %161 = vperm.xlu0 %160, %v95
    %v162 = vpop.permute.xlu0 %161
    %165 = vset.pattern.permute.xlu0 0
    %166 = vperm.xlu0 %165, %v96
    %v167 = vpop.permute.xlu0 %166
    %170 = vset.pattern.permute.xlu0 0
    %171 = vperm.xlu0 %170, %v97
    %v172 = vpop.permute.xlu0 %171
    %175 = vset.pattern.permute.xlu0 0
    %176 = vperm.xlu0 %175, %v98
    %v177 = vpop.permute.xlu0 %176
    %v179 = vmul.f32 %v67, %v102
    %v180 = vmul.f32 %v68, %v107
    %v181 = vmul.f32 %v69, %v112
    %v182 = vmul.f32 %v70, %v117
    %v183 = vmul.f32 %v71, %v122
    %v184 = vmul.f32 %v72, %v127
    %v185 = vmul.f32 %v73, %v132
    %v186 = vmul.f32 %v74, %v137
    %v187 = vmul.f32 %v75, %v142
    %v188 = vmul.f32 %v76, %v147
    %v189 = vmul.f32 %v77, %v152
    %v190 = vmul.f32 %v78, %v157
    %v191 = vmul.f32 %v79, %v162
    %v192 = vmul.f32 %v80, %v167
    %v193 = vmul.f32 %v81, %v172
    %v194 = vmul.f32 %v82, %v177
    %v195 = vround.ne.pseudo %v179
    %v196 = vround.ne.pseudo %v180
    %v197 = vround.ne.pseudo %v181
    %v198 = vround.ne.pseudo %v182
    %v199 = vround.ne.pseudo %v183
    %v200 = vround.ne.pseudo %v184
    %v201 = vround.ne.pseudo %v185
    %v202 = vround.ne.pseudo %v186
    %v203 = vround.ne.pseudo %v187
    %v204 = vround.ne.pseudo %v188
    %v205 = vround.ne.pseudo %v189
    %v206 = vround.ne.pseudo %v190
    %v207 = vround.ne.pseudo %v191
    %v208 = vround.ne.pseudo %v192
    %v209 = vround.ne.pseudo %v193
    %v210 = vround.ne.pseudo %v194
    %v211 = vmax.f32 %v195, -128.0
    %v212 = vmax.f32 %v196, -128.0
    %v213 = vmax.f32 %v197, -128.0
    %v214 = vmax.f32 %v198, -128.0
    %v215 = vmax.f32 %v199, -128.0
    %v216 = vmax.f32 %v200, -128.0
    %v217 = vmax.f32 %v201, -128.0
    %v218 = vmax.f32 %v202, -128.0
    %v219 = vmax.f32 %v203, -128.0
    %v220 = vmax.f32 %v204, -128.0
    %v221 = vmax.f32 %v205, -128.0
    %v222 = vmax.f32 %v206, -128.0
    %v223 = vmax.f32 %v207, -128.0
    %v224 = vmax.f32 %v208, -128.0
    %v225 = vmax.f32 %v209, -128.0
    %v226 = vmax.f32 %v210, -128.0
    %v227 = vmin.f32 %v211, 127.0
    %v228 = vmin.f32 %v212, 127.0
    %v229 = vmin.f32 %v213, 127.0
    %v230 = vmin.f32 %v214, 127.0
    %v231 = vmin.f32 %v215, 127.0
    %v232 = vmin.f32 %v216, 127.0
    %v233 = vmin.f32 %v217, 127.0
    %v234 = vmin.f32 %v218, 127.0
    %v235 = vmin.f32 %v219, 127.0
    %v236 = vmin.f32 %v220, 127.0
    %v237 = vmin.f32 %v221, 127.0
    %v238 = vmin.f32 %v222, 127.0
    %v239 = vmin.f32 %v223, 127.0
    %v240 = vmin.f32 %v224, 127.0
    %v241 = vmin.f32 %v225, 127.0
    %v242 = vmin.f32 %v226, 127.0
    %v243 = vld [vmem:[#allocation2] sm:$0xff]
    %v244 = vpack.c.bf16 %v66, %v66
    %v245 = vpack.c.bf16 %v228, %v227
    %v246 = vpack.c.bf16 %v230, %v229
    %v247 = vpack.c.bf16 %v232, %v231
    %v248 = vpack.c.bf16 %v234, %v233
    %v249 = vpack.c.bf16 %v236, %v235
    %v250 = vpack.c.bf16 %v238, %v237
    %v251 = vpack.c.bf16 %v240, %v239
    %v252 = vpack.c.bf16 %v242, %v241
    %253 = vmatprep.subr.bf16.mxu0 0
    %254 = vmatpush1.bf16.xpose.msra.mxu0 %v252
    %255 = vmatprep.subr.bf16.mxu0 0
    %256 = vmatpush1.bf16.xpose.msra.mxu0 %v251
    %257 = vmatprep.subr.bf16.mxu0 0
    %258 = vmatpush1.bf16.xpose.msra.mxu0 %v250
    %259 = vmatprep.subr.bf16.mxu0 0
    %260 = vmatpush1.bf16.xpose.msra.mxu0 %v249
    %261 = vmatprep.subr.bf16.mxu0 0
    %262 = vmatpush1.bf16.xpose.msra.mxu0 %v248
    %263 = vmatprep.subr.bf16.mxu0 0
    %264 = vmatpush1.bf16.xpose.msra.mxu0 %v247
    %265 = vmatprep.subr.bf16.mxu0 0
    %266 = vmatpush1.bf16.xpose.msra.mxu0 %v246
    %267 = vmatprep.subr.bf16.mxu0 0
    %268 = vmatpush1.bf16.xpose.msra.mxu0 %v245
    %269 = vmatprep.subr.bf16.mxu0 0
    %270 = vmatpush2.bf16.xpose.msra.mxu0 0
    %271 = vmatprep.subr.bf16.mxu0 0
    %272 = vmatpush2.bf16.xpose.msra.mxu0 0
    %273 = vmatprep.subr.bf16.mxu0 0
    %274 = vmatpush2.bf16.xpose.msra.mxu0 0
    %275 = vmatprep.subr.bf16.mxu0 0
    %276 = vmatpush2.bf16.xpose.msra.mxu0 0
    %277 = vmatprep.subr.bf16.mxu0 0
    %278 = vmatpush2.bf16.xpose.msra.mxu0 0
    %279 = vmatprep.subr.bf16.mxu0 0
    %280 = vmatpush2.bf16.xpose.msra.mxu0 0
    %281 = vmatprep.subr.bf16.mxu0 0
    %282 = vmatpush2.bf16.xpose.msra.mxu0 0
    %283 = vmatprep.subr.bf16.mxu0 0
    %284 = vmatpush2.bf16.xpose.msra.mxu0 0
    %285 = vmatprep.mubr.bf16.mxu0 0
    %286 = vmatmul.mubr.bf16.gmra.mxu0 %v244
    %v287 = vpop.f32.mrf.mxu0
    %v288 = vadd.f32 0.0, %v287
    %v289 = vpop.f32.mrf.mxu0
    %v290 = vpop.f32.mrf.mxu0
    %v291 = vpop.f32.mrf.mxu0
    %292 = vdwg.mxu0
    %v293 = vadd.f32 %v243, %v288
    %294 = vst [vmem:[#allocation2] sm:$0xff] %v293
    // Predicated region
    $region38: #{tpu_custom_call.1} parent=1 // pred_check
      %p295 = pneg %p50
    $region39: #{tpu_custom_call.1} parent=1 // pred_check_branch
      %297 = sbr.rel (%p295) target = $region41
    $region40: #{tpu_custom_call.1} parent=1 // pred_region
      %v298 = vld [vmem:[#allocation2] sm:$0xff]
      %v299 = vld [vmem:[%s4] sm:$0x1]
      %v301 = vlaneseq
      %v302 = vshrl.u32 %v301, 7
      %v303 = vsub.s32 0, %v302
      %v304 = vrot.slane %v299, %v303
      %v306 = vmul.f32 %v298, %v304
      %v307 = vld [vmem:[%s5] sm:$0x1]
      %v309 = vlaneseq
      %v310 = vshrl.u32 %v309, 7
      %v311 = vsub.s32 0, %v310
      %v312 = vrot.slane %v307, %v311
      %v314 = vadd.f32 %v306, %v312
      %v315 = vmax.f32 %v314, 0.0
      %316 = vst [vmem:[#allocation8] sm:$0xff] %v315
    $region41: #{tpu_custom_call.1} parent=1 // pred_fallthru
      _
    // Predicated region
    $region42: #{tpu_custom_call.1} parent=1 // pred_check
      _
    $region43: #{tpu_custom_call.1} parent=1 // pred_check_branch
      %318 = sbr.rel (0) target = $region45
    $region44: #{tpu_custom_call.1} parent=1 // pred_region
      %s320 = ssub.s32 128, 128
      %321 = vsyncadd [#allocation5], %s320
      %s323 = sshll.u32 [#allocation8], 4
      %s324 = int_to_ptr.vmem [resolvable:$true] %s323
      %326 = dma.vmem_to_hbm [thread:$0]  %s324, 128, %s6, [#allocation5]
    $region45: #{tpu_custom_call.1} parent=1 // pred_fallthru
      _
    // Predicated region
    $region46: #{tpu_custom_call.1} parent=1 // pred_check
      _
    $region47: #{tpu_custom_call.1} parent=1 // pred_check_branch
      %328 = sbr.rel (0) target = $region49
    $region48: #{tpu_custom_call.1} parent=1 // pred_region
      %329 = dma.done [#allocation5], 128
    $region49: #{tpu_custom_call.1} parent=1 // pred_fallthru
      _
    %330 = vsyncpa [#allocation4], 1
    %331 = vsyncpa [#allocation5], 1
    %332 = vsyncpa [#allocation6], 1

</llo_original>
